<compile_context>
chip_gen: v7x
topology: tpu7x:2x2x1
jax: 0.10.0
libtpu: 0.0.40
codegen_flags: <defaults>
</compile_context>

<pallas_src>
import functools

import jax
import jax.numpy as jnp
from jax.experimental import pallas as pl
from jax.experimental.pallas import tpu as pltpu


def _ce_kernel(logits_ref, target_ref, out_ref, *, total_n, tile_m):
    i = pl.program_id(0)

    x = logits_ref[...].astype(jnp.float32)                       # (tm, C) f32 compute
    m = jnp.max(x, axis=1, keepdims=True)                          # (tm, 1)
    lse = jnp.log(jnp.sum(jnp.exp(x - m), axis=1, keepdims=True))  # (tm, 1)

    lbl = target_ref[...]                                          # (tm, 1) int32
    col = jax.lax.broadcasted_iota(jnp.int32, x.shape, 1)
    picked = jnp.sum(jnp.where(col == lbl, x, jnp.float32(0.0)),
                     axis=1, keepdims=True)                        # (tm, 1) = x[row, lbl]

    nll = m + lse - picked                                         # (tm, 1) per-row NLL

    # Mask rows beyond the true batch size (ragged last tile reads padded data).
    row = jax.lax.broadcasted_iota(jnp.int32, nll.shape, 0) + i * tile_m
    nll = jnp.where(row < total_n, nll, jnp.float32(0.0))

    partial = jnp.sum(nll)                                         # this tile's NLL sum

    # Lane-dense (8,128) output block: partial at [0,0], zeros elsewhere.
    srow = jax.lax.broadcasted_iota(jnp.int32, (8, 128), 0)
    slane = jax.lax.broadcasted_iota(jnp.int32, (8, 128), 1)
    out_ref[...] = jnp.where((srow == 0) & (slane == 0), partial, jnp.float32(0.0))


def cross_entropy_loss(logits, target, *, tile_m=None, target_tile_bytes=4 * 1024 * 1024):
    """Mean cross-entropy loss. logits: (N, C) float (f32 or bf16); target: (N,) int."""
    n, c = logits.shape
    itemsize = jnp.dtype(logits.dtype).itemsize

    if tile_m is None:
        # Size the logits block to ~target_tile_bytes per buffer (double-buffered
        # by the pipeline) so it fits comfortably even in v7x's smaller VMEM.
        tile_m = target_tile_bytes // max(c * itemsize, 1)
        tile_m = max(8, min(tile_m, 8192))
    # Keep the sublane dim a multiple of 8 and don't exceed (padded) N.
    tile_m = max(8, (int(tile_m) // 8) * 8)
    n_pad8 = ((n + 7) // 8) * 8
    tile_m = min(tile_m, n_pad8)
    tile_m = max(8, (tile_m // 8) * 8)

    num_tiles = -(-n // tile_m)  # ceil(n / tile_m); ragged last tile masked in-kernel

    target2d = target.astype(jnp.int32).reshape(n, 1)
    kernel = functools.partial(_ce_kernel, total_n=n, tile_m=tile_m)

    partials = pl.pallas_call(
        kernel,
        out_shape=jax.ShapeDtypeStruct((num_tiles * 8, 128), jnp.float32),
        grid_spec=pltpu.PrefetchScalarGridSpec(
            num_scalar_prefetch=0,
            grid=(num_tiles,),
            in_specs=[
                pl.BlockSpec((tile_m, c), lambda i: (i, 0)),
                pl.BlockSpec((tile_m, 1), lambda i: (i, 0)),
            ],
            out_specs=pl.BlockSpec((8, 128), lambda i: (i, 0)),
        ),
        compiler_params=pltpu.CompilerParams(
            dimension_semantics=("parallel",),          # independent tiles -> megacore OK
            vmem_limit_bytes=32 * 1024 * 1024,          # room for double-buffered big tiles
        ),
    )(logits, target2d)

    return jnp.sum(partials) / jnp.float32(n)


def _reference(logits, target):
    logp = jax.nn.log_softmax(logits.astype(jnp.float32), axis=1)
    nll = -jnp.take_along_axis(logp, target.reshape(-1, 1), axis=1)[:, 0]
    return jnp.mean(nll)


if __name__ == "__main__":
    key = jax.random.PRNGKey(0)
    k1, k2 = jax.random.split(key)
    N, C = 40, 128  # N not a multiple of the tile below -> exercises ragged masking
    logits = jax.random.normal(k1, (N, C), dtype=jnp.float32)
    target = jax.random.randint(k2, (N,), 0, C, dtype=jnp.int32)

    # Small explicit tile so the demo covers multiple grid steps + a ragged last tile.
    loss = cross_entropy_loss(logits, target, tile_m=16)
    jax.block_until_ready(loss)

    ref = _reference(logits, target)
    assert jnp.allclose(loss, ref, atol=1e-5, rtol=1e-5), (loss, ref)

    # Also exercise the auto-sized (large-tile) path.
    loss2 = cross_entropy_loss(logits, target)
    jax.block_until_ready(loss2)
    assert jnp.allclose(loss2, ref, atol=1e-5, rtol=1e-5), (loss2, ref)

    print("KERNEL_OK")
</pallas_src>

<mosaic_0001>
module attributes {stable_mosaic.version = 11 : i64} {
  func.func @_ce_kernel(%arg0: i32, %arg1: memref<16x128xf32, #tpu.memory_space<vmem>>, %arg2: memref<16x1xi32, #tpu.memory_space<vmem>>, %arg3: memref<8x128xf32, #tpu.memory_space<vmem>>) attributes {dimension_semantics = [#tpu.dimension_semantics<parallel>], iteration_bounds = array<i64: 3>, scalar_prefetch = 0 : i64, scratch_operands = 0 : i64, tpu.core_type = #tpu.core_type<tc>, window_params = [{transform_indices = @transform_0, window_bounds = array<i64: 16, 128>}, {transform_indices = @transform_1, window_bounds = array<i64: 16, 1>}, {transform_indices = @transform_2, window_bounds = array<i64: 8, 128>}]} {
    %c0 = arith.constant 0 : index
    %c0_0 = arith.constant 0 : index
    %0 = vector.load %arg1[%c0, %c0_0] : memref<16x128xf32, #tpu.memory_space<vmem>>, vector<16x128xf32>
    %cst = arith.constant dense<0xFF800000> : vector<16xf32>
    %1 = vector.multi_reduction <maximumf>, %0, %cst [1] : vector<16x128xf32> to vector<16xf32>
    %2 = vector.shape_cast %1 : vector<16xf32> to vector<16x1xf32>
    %3 = vector.broadcast %2 : vector<16x1xf32> to vector<16x128xf32>
    %4 = arith.subf %0, %3 : vector<16x128xf32>
    %5 = math.exp %4 : vector<16x128xf32>
    %cst_1 = arith.constant dense<0.000000e+00> : vector<16xf32>
    %6 = vector.multi_reduction <add>, %5, %cst_1 [1] : vector<16x128xf32> to vector<16xf32>
    %7 = vector.shape_cast %6 : vector<16xf32> to vector<16x1xf32>
    %8 = math.log %7 : vector<16x1xf32>
    %c0_2 = arith.constant 0 : index
    %c0_3 = arith.constant 0 : index
    %9 = vector.load %arg2[%c0_2, %c0_3] : memref<16x1xi32, #tpu.memory_space<vmem>>, vector<16x1xi32>
    %10 = tpu.iota {dimensions = array<i32: 1>} : vector<16x128xi32>
    %11 = vector.broadcast %9 : vector<16x1xi32> to vector<16x128xi32>
    %12 = arith.cmpi eq, %10, %11 : vector<16x128xi32>
    %cst_4 = arith.constant 0.000000e+00 : f32
    %13 = vector.broadcast %cst_4 : f32 to vector<16x128xf32>
    %14 = arith.select %12, %0, %13 : vector<16x128xi1>, vector<16x128xf32>
    %cst_5 = arith.constant dense<0.000000e+00> : vector<16xf32>
    %15 = vector.multi_reduction <add>, %14, %cst_5 [1] : vector<16x128xf32> to vector<16xf32>
    %16 = vector.shape_cast %15 : vector<16xf32> to vector<16x1xf32>
    %17 = arith.addf %2, %8 : vector<16x1xf32>
    %18 = arith.subf %17, %16 : vector<16x1xf32>
    %19 = tpu.iota {dimensions = array<i32: 0>} : vector<16x1xi32>
    %c16_i32 = arith.constant 16 : i32
    %20 = arith.muli %arg0, %c16_i32 : i32
    %21 = vector.broadcast %20 : i32 to vector<16x1xi32>
    %22 = arith.addi %19, %21 : vector<16x1xi32>
    %c40_i32 = arith.constant 40 : i32
    %23 = vector.broadcast %c40_i32 : i32 to vector<16x1xi32>
    %24 = arith.cmpi slt, %22, %23 : vector<16x1xi32>
    %cst_6 = arith.constant 0.000000e+00 : f32
    %25 = vector.broadcast %cst_6 : f32 to vector<16x1xf32>
    %26 = arith.select %24, %18, %25 : vector<16x1xi1>, vector<16x1xf32>
    %27 = vector.shape_cast %26 : vector<16x1xf32> to vector<1x16x1xf32>
    %cst_7 = arith.constant dense<0.000000e+00> : vector<1xf32>
    %28 = vector.multi_reduction <add>, %27, %cst_7 [1, 2] : vector<1x16x1xf32> to vector<1xf32>
    %29 = vector.shape_cast %28 : vector<1xf32> to vector<1x1x1xf32>
    %30 = vector.extract %29[0, 0, 0] : f32 from vector<1x1x1xf32>
    %31 = tpu.iota {dimensions = array<i32: 0>} : vector<8x128xi32>
    %32 = tpu.iota {dimensions = array<i32: 1>} : vector<8x128xi32>
    %c0_i32 = arith.constant 0 : i32
    %33 = vector.broadcast %c0_i32 : i32 to vector<8x128xi32>
    %34 = arith.cmpi eq, %31, %33 : vector<8x128xi32>
    %c0_i32_8 = arith.constant 0 : i32
    %35 = vector.broadcast %c0_i32_8 : i32 to vector<8x128xi32>
    %36 = arith.cmpi eq, %32, %35 : vector<8x128xi32>
    %37 = arith.andi %34, %36 : vector<8x128xi1>
    %cst_9 = arith.constant 0.000000e+00 : f32
    %38 = vector.broadcast %30 : f32 to vector<8x128xf32>
    %39 = vector.broadcast %cst_9 : f32 to vector<8x128xf32>
    %40 = arith.select %37, %38, %39 : vector<8x128xi1>, vector<8x128xf32>
    %c0_10 = arith.constant 0 : index
    %c0_11 = arith.constant 0 : index
    %41 = vector.load %arg3[%c0_10, %c0_11] : memref<8x128xf32, #tpu.memory_space<vmem>>, vector<8x128xf32>
    tpu.vector_store %arg3[%c0_10, %c0_11], %40 {strides = array<i32>} : memref<8x128xf32, #tpu.memory_space<vmem>>, vector<8x128xf32>,
    return
  }
  func.func @transform_0(%arg0: i32) -> (i32, i32) {
    %c0_i32 = arith.constant 0 : i32
    %c0_i32_0 = arith.constant 0 : i32
    return %arg0, %c0_i32 : i32, i32
  }
  func.func @transform_1(%arg0: i32) -> (i32, i32) {
    %c0_i32 = arith.constant 0 : i32
    %c0_i32_0 = arith.constant 0 : i32
    return %arg0, %c0_i32 : i32, i32
  }
  func.func @transform_2(%arg0: i32) -> (i32, i32) {
    %c0_i32 = arith.constant 0 : i32
    %c0_i32_0 = arith.constant 0 : i32
    return %arg0, %c0_i32 : i32, i32
  }
}

</mosaic_0001>

<llo_original>
// kernel: tpu_custom_call.1
$region0: #{tpu_custom_call.1}
  #allocation0 [shape = 'u32[]', space=smem, size = 0x4, offset = 0x4, fixed_abs, tag = 'smem constant byte address 0x4 - core index']
  #allocation1 [shape = 'u32[144,128]{1,0:T(1,128)}', space=vmem, size = 0x12000, scoped, tag = 'internal scratch']
  %s0 = inlined_call_operand.vmem [shape: f32[40,128], index: 0, kind: input, shape index: {}]
  %s1 = inlined_call_operand.vmem [shape: s32[40,1], index: 1, kind: input, shape index: {}]
  %s2 = inlined_call_operand.hbm [shape: f32[24,128], index: 2, kind: output, shape index: {}]
  %s3 = sld [smem:[#allocation0]]
  $region41: #{tpu_custom_call.1} parent=0
    _
  %s5 = ssub.s32 1, %s3
  %s6 = scalar_select 0, %s5, %s3
  $region1: #{tpu_custom_call.1} parent=0
    #allocation2 [shape = 'u8[8192]{0}', space=vmem, size = 0x2000, scoped, tag = 'output window, operand 0']
    #allocation3 [shape = 's32[2]{0}', space=sflag, size = 0x8, scoped, tag = 'scoped memory for tpu_custom_call.1']
    %7 = vsyncpa [#allocation3], 0
    %s8 = scalar_lea.sflag [#allocation3], 1
    %9 = vsyncpa %s8, 0
    loop: start=0, step=1, limit=5
    $region2: #{tpu_custom_call.1} parent=1 // loop_pre_header
      _
    $region3: #{tpu_custom_call.1} parent=1 // loop_header
      %s11 = sphi 0, %s15
      %p12 = scmp.ge.s32.totalorder %s11, 5
      %s21 = sphi 0, %s23
      %s24 = sphi 0, %s21
      %s25 = sphi 0, %s24
      %s41 = sphi 0, %s25
      %s47 = sphi 0, %s49
      %s50 = sphi 0, %s47
      %s51 = sphi 0, %s50
      %s67 = sphi 0, %s51
      %s73 = sphi 0, %s75
      %s76 = sphi 0, %s73
      %s77 = sphi 0, %s76
      %s93 = sphi 0, %s77
    $region4: #{tpu_custom_call.1} parent=1 // loop_header_branch
      %14 = sbr.rel (%p12) target = $region8
    $region5: #{tpu_custom_call.1} parent=1 // loop_body
      %s16 = ssub.s32 %s11, 1
      %s17 = ssub.s32 %s11, 2
      %s18 = sadd.s32 %s11, 1
      %s19 = ssub.s32 %s11, %s18
      %p20 = scmp.eq.s32.totalorder %s19, 0
      %s22 = sadd.s32 %s21, 1
      %s23 = scalar_select %p20, %s21, %s22
      %p26 = pneg %p20
      %p27 = scmp.eq.s32.totalorder %s11, 2
      %p28 = por %p26, %p27
      %p29 = scmp.ne.s32.totalorder %s21, %s24
      %p30 = scmp.eq.s32.totalorder %s11, 0
      %p31 = por %p29, %p30
      %p32 = scmp.ne.s32.totalorder %s21, %s24
      %p33 = scmp.eq.s32.totalorder %s16, 2
      %p34 = por %p32, %p33
      %p35 = scmp.ne.s32.totalorder %s24, %s25
      %p36 = scmp.eq.s32.totalorder %s16, 0
      %p37 = por %p35, %p36
      %p38 = scmp.ne.s32.totalorder %s24, %s25
      %p39 = scmp.eq.s32.totalorder %s17, 2
      %p40 = por %p38, %p39
      %p42 = scmp.ne.s32.totalorder %s25, %s41
      %p43 = scmp.eq.s32.totalorder %s17, 0
      %p44 = por %p42, %p43
      %s45 = ssub.s32 %s11, %s18
      %p46 = scmp.eq.s32.totalorder %s45, 0
      %s48 = sadd.s32 %s47, 1
      %s49 = scalar_select %p46, %s47, %s48
      %p52 = pneg %p46
      %p53 = scmp.eq.s32.totalorder %s11, 2
      %p54 = por %p52, %p53
      %p55 = scmp.ne.s32.totalorder %s47, %s50
      %p56 = scmp.eq.s32.totalorder %s11, 0
      %p57 = por %p55, %p56
      %p58 = scmp.ne.s32.totalorder %s47, %s50
      %p59 = scmp.eq.s32.totalorder %s16, 2
      %p60 = por %p58, %p59
      %p61 = scmp.ne.s32.totalorder %s50, %s51
      %p62 = scmp.eq.s32.totalorder %s16, 0
      %p63 = por %p61, %p62
      %p64 = scmp.ne.s32.totalorder %s50, %s51
      %p65 = scmp.eq.s32.totalorder %s17, 2
      %p66 = por %p64, %p65
      %p68 = scmp.ne.s32.totalorder %s51, %s67
      %p69 = scmp.eq.s32.totalorder %s17, 0
      %p70 = por %p68, %p69
      %s71 = ssub.s32 %s11, %s18
      %p72 = scmp.eq.s32.totalorder %s71, 0
      %s74 = sadd.s32 %s73, 1
      %s75 = scalar_select %p72, %s73, %s74
      %p78 = pneg %p72
      %p79 = scmp.eq.s32.totalorder %s11, 2
      %p80 = por %p78, %p79
      %p81 = scmp.ne.s32.totalorder %s73, %s76
      %p82 = scmp.eq.s32.totalorder %s11, 0
      %p83 = por %p81, %p82
      %p84 = scmp.ne.s32.totalorder %s73, %s76
      %p85 = scmp.eq.s32.totalorder %s16, 2
      %p86 = por %p84, %p85
      %p87 = scmp.ne.s32.totalorder %s76, %s77
      %p88 = scmp.eq.s32.totalorder %s16, 0
      %p89 = por %p87, %p88
      %p90 = scmp.ne.s32.totalorder %s76, %s77
      %p91 = scmp.eq.s32.totalorder %s17, 2
      %p92 = por %p90, %p91
      %p94 = scmp.ne.s32.totalorder %s77, %s93
      %p95 = scmp.eq.s32.totalorder %s17, 0
      %p96 = por %p94, %p95
      %p97 = scmp.le.s32.totalorder 1, %s11
      %p98 = scmp.lt.s32.totalorder %s11, 4
      %p99 = pnand %p97, %p98
      %p100 = pneg %p99
      // Predicated region
      $region9: #{tpu_custom_call.1} parent=5 // pred_check
        _
      $region10: #{tpu_custom_call.1} parent=5 // pred_check_branch
        %102 = sbr.rel (%p99) target = $region12
      $region11: #{tpu_custom_call.1} parent=5 // pred_region
        %s103 = ssub.s32 %s11, 1
      $region12: #{tpu_custom_call.1} parent=5 // pred_fallthru
        _
      %p104 = scmp.lt.s32.totalorder %s11, 3
      // Predicated region
      $region13: #{tpu_custom_call.1} parent=5 // pred_check
        %p105 = pneg %p104
      $region14: #{tpu_custom_call.1} parent=5 // pred_check_branch
        %107 = sbr.rel (%p105) target = $region16
      $region15: #{tpu_custom_call.1} parent=5 // pred_region
        // Predicated region
        $region17: #{tpu_custom_call.1} parent=15 // pred_check
          %p108 = pneg %p31
        $region18: #{tpu_custom_call.1} parent=15 // pred_check_branch
          %110 = sbr.rel (%p108) target = $region20
        $region19: #{tpu_custom_call.1} parent=15 // pred_region
          %s111 = smul.u32 2, %s11
          %s112 = ssub.s32 5, %s111
          %p113 = scmp.lt.s32.totalorder %s112, 2
          %s114 = scalar_select %p113, %s112, 2
          %s115 = smul.u32 128, %s114
          %p116 = scmp.lt.s32.totalorder %s111, 4
          %s117 = scalar_select %p116, %s111, 4
          %s118 = smul.addr %s117, 8
          %s119 = scalar_lea.vmem %s0, %s118
          %s120 = smul.u32 2, %s11
          %s121 = ssub.s32 5, %s120
          %p122 = scmp.lt.s32.totalorder %s121, 2
          %s123 = scalar_select %p122, %s121, 2
          %s124 = smul.u32 128, %s123
        $region20: #{tpu_custom_call.1} parent=15 // pred_fallthru
          _
        // Predicated region
        $region21: #{tpu_custom_call.1} parent=15 // pred_check
          %p125 = pneg %p57
        $region22: #{tpu_custom_call.1} parent=15 // pred_check_branch
          %127 = sbr.rel (%p125) target = $region24
        $region23: #{tpu_custom_call.1} parent=15 // pred_region
          %s128 = smul.u32 2, %s11
          %s129 = ssub.s32 5, %s128
          %p130 = scmp.lt.s32.totalorder %s129, 2
          %s131 = scalar_select %p130, %s129, 2
          %s132 = smul.u32 128, %s131
          %p133 = scmp.lt.s32.totalorder %s128, 4
          %s134 = scalar_select %p133, %s128, 4
          %s135 = smul.addr %s134, 8
          %s136 = scalar_lea.vmem %s1, %s135
          %s137 = smul.u32 2, %s11
          %s138 = ssub.s32 5, %s137
          %p139 = scmp.lt.s32.totalorder %s138, 2
          %s140 = scalar_select %p139, %s138, 2
          %s141 = smul.u32 128, %s140
        $region24: #{tpu_custom_call.1} parent=15 // pred_fallthru
          _
      $region16: #{tpu_custom_call.1} parent=5 // pred_fallthru
        _
      %p142 = scmp.le.s32.totalorder 1, %s11
      %p143 = scmp.lt.s32.totalorder %s11, 4
      %p144 = pnand %p142, %p143
      %p145 = pneg %p144
      // Predicated region
      $region25: #{tpu_custom_call.1} parent=5 // pred_check
        _
      $region26: #{tpu_custom_call.1} parent=5 // pred_check_branch
        %147 = sbr.rel (%p144) target = $region28
      $region27: #{tpu_custom_call.1} parent=5 // pred_region
        %s148 = ssub.s32 %s11, 1
        %s149 = smul.u32 2, %s16
        %s150 = ssub.s32 5, %s149
        %p151 = scmp.lt.s32.totalorder %s150, 2
        %s152 = scalar_select %p151, %s150, 2
        %s153 = smul.u32 128, %s152
        %p154 = scmp.lt.s32.totalorder %s149, 4
        %s155 = scalar_select %p154, %s149, 4
        %s156 = smul.addr %s155, 8
        %s157 = scalar_lea.vmem %s0, %s156
        %p158 = pneg %p37
        %p159 = pneg %p34
        %s160 = smul.u32 2, %s16
        %s161 = ssub.s32 5, %s160
        %p162 = scmp.lt.s32.totalorder %s161, 2
        %s163 = scalar_select %p162, %s161, 2
        %s164 = smul.u32 128, %s163
        %p165 = scmp.lt.s32.totalorder %s160, 4
        %s166 = scalar_select %p165, %s160, 4
        %s167 = smul.addr %s166, 8
        %s168 = scalar_lea.vmem %s1, %s167
        %p169 = pneg %p63
        %p170 = pneg %p60
        %p171 = pneg %p89
        %p172 = pneg %p86
        %s173 = sand.u32 %s76, 1
        %s174 = scalar_lea.sflag [#allocation3], %s173
        %s175 = sand.u32 %s76, 1
        %s176 = smul.addr %s175, 8
        %s177 = scalar_lea.vmem [#allocation2], %s176
        %s178 = smul.u32 2, %s16
        %s179 = ssub.s32 5, %s178
        %p180 = scmp.lt.s32.totalorder %s179, 2
        %s181 = scalar_select %p180, %s179, 2
        %s182 = smul.u32 128, %s181
        %p183 = scmp.lt.s32.totalorder %s178, 4
        %s184 = scalar_select %p183, %s178, 4
        %s185 = smul.addr %s184, 8
        %s186 = scalar_lea.vmem %s0, %s185
        %s187 = smul.u32 2, %s16
        %s188 = ssub.s32 5, %s187
        %p189 = scmp.lt.s32.totalorder %s188, 2
        %s190 = scalar_select %p189, %s188, 2
        %s191 = smul.u32 128, %s190
        %s192 = smul.u32 2, %s16
        %s193 = ssub.s32 5, %s192
        %p194 = scmp.lt.s32.totalorder %s193, 2
        %s195 = scalar_select %p194, %s193, 2
        %s196 = smul.u32 128, %s195
        %p197 = scmp.lt.s32.totalorder %s192, 4
        %s198 = scalar_select %p197, %s192, 4
        %s199 = smul.addr %s198, 8
        %s200 = scalar_lea.vmem %s1, %s199
        %s201 = smul.u32 2, %s16
        %s202 = ssub.s32 5, %s201
        %p203 = scmp.lt.s32.totalorder %s202, 2
        %s204 = scalar_select %p203, %s202, 2
        %s205 = smul.u32 128, %s204
        %v206 = vld [vmem:[%s186] sm:$0xff]
        %v207 = vld [vmem:[%s186 + $0x8] sm:$0xff]
        %208 = vmax.xlane.f32.xlu0 %v206
        %v209 = vpop.xlane.xlu0 %208
        %210 = vmax.xlane.f32.xlu0 %v207
        %v211 = vpop.xlane.xlu0 %210
        %v212 = vsub.f32 %v206, %v209
        %v213 = vsub.f32 %v207, %v211
        %v214 = vmul.f32 %v212, 1.442695
        %v215 = vpow.pop %v214
        %v216 = vmul.f32 %v213, 1.442695
        %v217 = vpow.pop %v216
        %218 = vadd.xlane.f32.xlu0 %v215
        %v219 = vpop.xlane.xlu0 %218
        %220 = vadd.xlane.f32.xlu0 %v217
        %v221 = vpop.xlane.xlu0 %220
        %v222 = vlog2.pop %v219
        %v223 = vmul.f32 %v222, 0.6931472
        %v224 = vlog2.pop %v221
        %v225 = vmul.f32 %v224, 0.6931472
        %v226 = vld [vmem:[%s200] sm:$0xff]
        %v227 = vld [vmem:[%s200 + $0x8] sm:$0xff]
        %v228 = vlaneseq
        %v229 = vand.u32 %v228, 127
        %230 = vset.pattern.permute.xlu0 0
        %231 = vperm.xlu0 %230, %v226
        %v232 = vpop.permute.xlu0 %231
        %233 = vset.pattern.permute.xlu0 0
        %234 = vperm.xlu0 %233, %v227
        %v235 = vpop.permute.xlu0 %234
        %vm236 = vcmp.eq.s32.totalorder %v229, %v232
        %vm237 = vcmp.eq.s32.totalorder %v229, %v235
        %v238 = vsel %vm236, %v206, 0.0
        %v239 = vsel %vm237, %v207, 0.0
        %240 = vadd.xlane.f32.xlu0 %v238
        %v241 = vpop.xlane.xlu0 %240
        %242 = vadd.xlane.f32.xlu0 %v239
        %v243 = vpop.xlane.xlu0 %242
        %v244 = vadd.f32 %v209, %v223
        %v245 = vadd.f32 %v211, %v225
        %v246 = vsub.f32 %v244, %v241
        %v247 = vsub.f32 %v245, %v243
        %v248 = vlaneseq
        %v249 = vshrl.u32 %v248, 7
        %v250 = vadd.s32 %v249, 8
        %s251 = smul.u32 %s16, 16
        %v252 = vstv %s251
        %v253 = vadd.s32 %v249, %v252
        %v254 = vadd.s32 %v250, %v252
        %vm255 = vcmp.lt.s32.totalorder %v253, 40
        %vm256 = vcmp.lt.s32.totalorder %v254, 40
        %v257 = vsel %vm255, %v246, 0.0
        %v258 = vsel %vm256, %v247, 0.0
        %vm259 = vcmask 7168
        %v260 = vsel %vm259, %v257, 0.0
        %v261 = vsel %vm259, %v258, 0.0
        %v262 = vadd.f32 %v260, %v261
        %263 = vadd.xlane.f32.xlu0 %v262
        %v264 = vpop.xlane.xlu0 %263
        %v265 = vrot.slane %v264, 4
        %v266 = vadd.f32 %v264, %v265
        %v267 = vrot.slane %v266, 2
        %v268 = vadd.f32 %v266, %v267
        %v269 = vrot.slane %v268, 1
        %v270 = vadd.f32 %v268, %v269
        %s271 = vtos %v270
        %vm272 = vcmp.eq.s32.totalorder %v249, 0
        %vm273 = vcmp.eq.s32.totalorder %v229, 0
        %vm274 = vmand %vm272, %vm273
        %v275 = vstv %s271
        %v276 = vsel %vm274, %v275, 0.0
        %277 = vst [vmem:[%s177] sm:$0xff] %v276
        %s278 = sand.u32 %s76, 1
        %s279 = scalar_lea.sflag [#allocation3], %s278
        %s280 = sand.u32 %s76, 1
        %s281 = smul.addr %s280, 8
        %s282 = scalar_lea.vmem [#allocation2], %s281
        // Predicated region
        $region29: #{tpu_custom_call.1} parent=27 // pred_check
          %p283 = pneg %p86
        $region30: #{tpu_custom_call.1} parent=27 // pred_check_branch
          %285 = sbr.rel (%p283) target = $region32
        $region31: #{tpu_custom_call.1} parent=27 // pred_region
          %s287 = ssub.s32 128, 128
          %288 = vsyncadd %s279, %s287
          %s289 = smul.addr %s16, 128
          %s290 = scalar_lea.hbm %s2, %s289
          %s292 = sshll.u32 %s282, 4
          %s293 = int_to_ptr.vmem [resolvable:$true] %s292
          %295 = dma.vmem_to_hbm [thread:$0]  %s293, 128, %s290, %s279
        $region32: #{tpu_custom_call.1} parent=27 // pred_fallthru
          _
      $region28: #{tpu_custom_call.1} parent=5 // pred_fallthru
        _
      %p296 = scmp.le.s32.totalorder 2, %s11
      // Predicated region
      $region33: #{tpu_custom_call.1} parent=5 // pred_check
        %p297 = pneg %p296
      $region34: #{tpu_custom_call.1} parent=5 // pred_check_branch
        %299 = sbr.rel (%p297) target = $region36
      $region35: #{tpu_custom_call.1} parent=5 // pred_region
        %s300 = ssub.s32 %s11, 2
        // Predicated region
        $region37: #{tpu_custom_call.1} parent=35 // pred_check
          %p301 = pneg %p92
        $region38: #{tpu_custom_call.1} parent=35 // pred_check_branch
          %303 = sbr.rel (%p301) target = $region40
        $region39: #{tpu_custom_call.1} parent=35 // pred_region
          %s304 = sand.u32 %s77, 1
          %s305 = scalar_lea.sflag [#allocation3], %s304
          %s306 = sand.u32 %s77, 1
          %s307 = smul.addr %s306, 8
          %s308 = scalar_lea.vmem [#allocation2], %s307
          %309 = dma.done %s305, 128
        $region40: #{tpu_custom_call.1} parent=35 // pred_fallthru
          _
      $region36: #{tpu_custom_call.1} parent=5 // pred_fallthru
        _
    $region6: #{tpu_custom_call.1} parent=1 // loop_footer
      %s15 = sadd.s32 1, %s11
    $region7: #{tpu_custom_call.1} parent=1 // loop_footer_branch
      %10 = sbr.rel target = $region3
    $region8: #{tpu_custom_call.1} parent=1 // loop_exit
      _
    %310 = vsyncpa [#allocation3], 1
    %s311 = scalar_lea.sflag [#allocation3], 1
    %312 = vsyncpa %s311, 1

</llo_original>
